<compile_context>
chip_gen: v7x
topology: tpu7x:2x2x1
jax: 0.10.0
libtpu: 0.0.40
codegen_flags: <defaults>
</compile_context>

<pallas_src>
import functools

import jax
import jax.numpy as jnp
from jax import lax
from jax.experimental import pallas as pl
from jax.experimental.pallas import tpu as pltpu


# --------------------------------------------------------------------------
# Fast path: pixel-row-major 4-D layout, HW % 128 == 0.
# --------------------------------------------------------------------------
def _dice_sums_rows_kernel(*refs, n_classes, n_rows, tile_rows, rows_per_acc,
                           tiles_per_chunk, n_chunks, apply_softmax,
                           approx_recip, has_mask, ragged):
    """Accumulates per-class Σ s·t[·m], Σ s²[·m], Σ t²[·m] over (R,128) slabs."""
    if has_mask:
        score_ref, tgt_ref, mask_ref, inter_ref, ssq_ref, tsq_ref = refs
    else:
        score_ref, tgt_ref, inter_ref, ssq_ref, tsq_ref = refs
        mask_ref = None

    ck = pl.program_id(1)
    t = pl.program_id(2)

    @pl.when(t == 0)
    def _():
        inter_ref[...] = jnp.zeros_like(inter_ref)
        ssq_ref[...] = jnp.zeros_like(ssq_ref)
        tsq_ref[...] = jnp.zeros_like(tsq_ref)

    n_fold = tile_rows // rows_per_acc

    def fold(x):
        # Elementwise (VALU-only) fold of the (R,128) slab into (rows_per_acc,128).
        if n_fold == 1:
            return x
        return jnp.sum(x.reshape(n_fold, rows_per_acc, 128), axis=0)

    def accumulate(row_valid):
        tgt = tgt_ref[0, 0].astype(jnp.int32)                 # (R, 128)
        m = None
        if has_mask:
            m = mask_ref[0, 0].astype(jnp.float32)            # (R, 128)
            if row_valid is not None:
                m = jnp.where(row_valid, m, 0.0)

        # Per-class slabs, cast in vregs.
        slabs = [score_ref[0, c].astype(jnp.float32) for c in range(n_classes)]
        if row_valid is not None:
            slabs = [jnp.where(row_valid, s, 0.0) for s in slabs]

        if apply_softmax:
            # Class axis handled as elementwise combines across the C slabs.
            mx = slabs[0]
            for s in slabs[1:]:
                mx = jnp.maximum(mx, s)
            exps = [jnp.exp(s - mx) for s in slabs]
            denom = exps[0]
            for e in exps[1:]:
                denom = denom + e
            inv = pl.reciprocal(denom, approx=approx_recip)   # EUP slot
            slabs = [e * inv for e in exps]
            if row_valid is not None:
                slabs = [jnp.where(row_valid, s, 0.0) for s in slabs]

        for c in range(n_classes):
            s = slabs[c]
            onehot = tgt == c                                  # (R, 128) bool
            if row_valid is not None:
                onehot = jnp.logical_and(onehot, row_valid)
            if has_mask:
                sm = s * m
                inter = jnp.where(onehot, sm, 0.0)             # s·t·m
                ssq = sm * s                                   # s·s·m
                tsq = jnp.where(onehot, m, 0.0)                # t·t·m
            else:
                inter = jnp.where(onehot, s, 0.0)              # s·t
                ssq = s * s                                    # s·s
                tsq = onehot.astype(jnp.float32)               # t·t
            inter_ref[0, 0, c] += fold(inter)
            ssq_ref[0, 0, c] += fold(ssq)
            tsq_ref[0, 0, c] += fold(tsq)

    if not ragged:
        accumulate(None)
    else:
        # Only the globally last tile pays for row-validity masking.
        is_last = jnp.logical_and(ck == n_chunks - 1, t == tiles_per_chunk - 1)

        @pl.when(jnp.logical_not(is_last))
        def _():
            accumulate(None)

        @pl.when(is_last)
        def _():
            row0 = (ck * tiles_per_chunk + t) * tile_rows
            rows = lax.broadcasted_iota(jnp.int32, (tile_rows, 128), 0)
            accumulate((rows + row0) < n_rows)


def _pick_tile_rows(n_rows, bytes_per_row, n_classes, max_rows_per_tile=None):
    """Row-tile size: multiple of 8 (or full), bounded IO + f32 slab budget."""
    if max_rows_per_tile is None:
        io_cap = (4 * 1024 * 1024) // max(bytes_per_row, 1)          # ~4 MiB/step
        slab_cap = (4 * 1024 * 1024) // (n_classes * 128 * 4)        # f32 slabs
        max_rows_per_tile = max(8, min(io_cap, slab_cap))
    if n_rows <= max_rows_per_tile:
        return n_rows                       # whole row axis in one block
    cap = max(8, (max_rows_per_tile // 8) * 8)
    # Prefer a tile that divides n_rows exactly (no ragged tail), as long as
    # it does not shrink the tile by more than ~2x.
    for r in range(cap, max(cap // 2 - 1, 0), -8):
        if r > 0 and n_rows % r == 0:
            return r
    return cap


def _pick_chunks(batch, n_tiles, requested):
    """Pixel-axis chunk count (v7x dual-TC when batch is tiny)."""
    n = requested if requested is not None else (2 if batch == 1 else 1)
    n = max(1, min(int(n), n_tiles))
    while n > 1 and n_tiles % n:
        n -= 1
    return n


def _run_rows_path(inputs, target, msk, n_classes, softmax, approx_recip,
                   max_rows_per_tile, n_pixel_chunks):
    B, C, H, W = inputs.shape
    n_rows = (H * W) // 128
    score = inputs.reshape(B, C, n_rows, 128)          # free reshapes only
    tgt = target.reshape(B, 1, n_rows, 128)
    has_mask = msk is not None
    if has_mask:
        msk = msk.reshape(B, 1, n_rows, 128)

    bytes_per_row = 128 * (C * score.dtype.itemsize + tgt.dtype.itemsize
                           + (msk.dtype.itemsize if has_mask else 0))
    tile_rows = _pick_tile_rows(n_rows, bytes_per_row, C, max_rows_per_tile)
    n_tiles = -(-n_rows // tile_rows)
    ragged = (n_rows % tile_rows) != 0
    n_chunks = _pick_chunks(B, n_tiles, n_pixel_chunks)
    tiles_per_chunk = n_tiles // n_chunks
    rows_per_acc = 8 if tile_rows % 8 == 0 else tile_rows

    kernel = functools.partial(
        _dice_sums_rows_kernel, n_classes=n_classes, n_rows=n_rows,
        tile_rows=tile_rows, rows_per_acc=rows_per_acc,
        tiles_per_chunk=tiles_per_chunk, n_chunks=n_chunks,
        apply_softmax=bool(softmax), approx_recip=approx_recip,
        has_mask=has_mask, ragged=ragged)

    def row_map(b, ck, t):
        return (b, 0, ck * tiles_per_chunk + t, 0)

    in_specs = [pl.BlockSpec((1, C, tile_rows, 128), row_map),
                pl.BlockSpec((1, 1, tile_rows, 128), row_map)]
    args = [score, tgt]
    if has_mask:
        in_specs.append(pl.BlockSpec((1, 1, tile_rows, 128), row_map))
        args.append(msk)

    # Lane-dense resident accumulators, one block per (batch, chunk).
    acc_spec = pl.BlockSpec((1, 1, C, rows_per_acc, 128),
                            lambda b, ck, t: (b, ck, 0, 0, 0))
    acc_shape = jax.ShapeDtypeStruct((B, n_chunks, C, rows_per_acc, 128),
                                     jnp.float32)

    inter_b, ssq_b, tsq_b = pl.pallas_call(
        kernel,
        out_shape=(acc_shape,) * 3,
        grid=(B, n_chunks, tiles_per_chunk),
        in_specs=in_specs,
        out_specs=(acc_spec,) * 3,
        compiler_params=pltpu.CompilerParams(
            dimension_semantics=("parallel", "parallel", "arbitrary"),
            vmem_limit_bytes=32 * 1024 * 1024),
    )(*args)

    reduce_axes = (0, 1, 3, 4)
    return (jnp.sum(inter_b, axis=reduce_axes),
            jnp.sum(ssq_b, axis=reduce_axes),
            jnp.sum(tsq_b, axis=reduce_axes))


# --------------------------------------------------------------------------
# Fallback path: flat 2-D (B, C, HW) layout when HW % 128 != 0 (no HBM pad).
# --------------------------------------------------------------------------
def _dice_sums_flat_kernel(*refs, n_classes, hw, tile_hw, apply_softmax,
                           approx_recip, has_mask, ragged):
    if has_mask:
        score_ref, tgt_ref, mask_ref, inter_ref, ssq_ref, tsq_ref = refs
    else:
        score_ref, tgt_ref, inter_ref, ssq_ref, tsq_ref = refs
        mask_ref = None

    t = pl.program_id(1)

    @pl.when(t == 0)
    def _():
        inter_ref[...] = jnp.zeros_like(inter_ref)
        ssq_ref[...] = jnp.zeros_like(ssq_ref)
        tsq_ref[...] = jnp.zeros_like(tsq_ref)

    def accumulate(valid):
        s = score_ref[0].astype(jnp.float32)            # (C, T)
        tgt = tgt_ref[0].astype(jnp.int32)              # (1, T)
        vb = None
        if valid is not None:
            vb = jnp.broadcast_to(valid, s.shape)
            s = jnp.where(vb, s, 0.0)
        if apply_softmax:
            s = s - jnp.max(s, axis=0, keepdims=True)
            e = jnp.exp(s)
            s = e * pl.reciprocal(jnp.sum(e, axis=0, keepdims=True),
                                  approx=approx_recip)
            if valid is not None:
                s = jnp.where(vb, s, 0.0)
        cls = lax.broadcasted_iota(jnp.int32, s.shape, 0)
        eq = jnp.broadcast_to(tgt, s.shape) == cls
        if valid is not None:
            eq = jnp.logical_and(eq, vb)
        if has_mask:
            m = mask_ref[0].astype(jnp.float32)
            if valid is not None:
                m = jnp.where(valid, m, 0.0)
            mb = jnp.broadcast_to(m, s.shape)
            sm = s * mb
            inter = jnp.sum(jnp.where(eq, sm, 0.0), axis=1, keepdims=True)
            ssq = jnp.sum(sm * s, axis=1, keepdims=True)
            tsq = jnp.sum(jnp.where(eq, mb, 0.0), axis=1, keepdims=True)
        else:
            inter = jnp.sum(jnp.where(eq, s, 0.0), axis=1, keepdims=True)
            ssq = jnp.sum(s * s, axis=1, keepdims=True)
            tsq = jnp.sum(eq.astype(jnp.float32), axis=1, keepdims=True)
        inter_ref[...] += inter[None]
        ssq_ref[...] += ssq[None]
        tsq_ref[...] += tsq[None]

    if not ragged:
        accumulate(None)
    else:
        is_last = t == (pl.num_programs(1) - 1)

        @pl.when(jnp.logical_not(is_last))
        def _():
            accumulate(None)

        @pl.when(is_last)
        def _():
            lane = lax.broadcasted_iota(jnp.int32, (1, tile_hw), 1)
            accumulate((t * tile_hw + lane) < hw)


def _pick_tile_flat(hw, bytes_per_px, max_tile_px=None):
    if max_tile_px is None:
        max_tile_px = max(128, (4 * 1024 * 1024) // max(bytes_per_px, 1))
    if hw < 128:
        return hw                                   # full (only) option
    tile = min((max_tile_px // 128) * 128, (hw // 128) * 128)
    return max(tile, 128)


def _run_flat_path(inputs, target, msk, n_classes, softmax, approx_recip,
                   max_tile_px):
    B, C, H, W = inputs.shape
    HW = H * W
    score = inputs.reshape(B, C, HW)
    tgt = target.reshape(B, 1, HW)
    has_mask = msk is not None
    if has_mask:
        msk = msk.reshape(B, 1, HW)

    bytes_per_px = (C * score.dtype.itemsize + tgt.dtype.itemsize
                    + (msk.dtype.itemsize if has_mask else 0))
    tile_hw = _pick_tile_flat(HW, bytes_per_px, max_tile_px)
    n_tiles = -(-HW // tile_hw)
    ragged = (HW % tile_hw) != 0

    kernel = functools.partial(
        _dice_sums_flat_kernel, n_classes=n_classes, hw=HW, tile_hw=tile_hw,
        apply_softmax=bool(softmax), approx_recip=approx_recip,
        has_mask=has_mask, ragged=ragged)

    px_map = lambda b, t: (b, 0, t)
    in_specs = [pl.BlockSpec((1, C, tile_hw), px_map),
                pl.BlockSpec((1, 1, tile_hw), px_map)]
    args = [score, tgt]
    if has_mask:
        in_specs.append(pl.BlockSpec((1, 1, tile_hw), px_map))
        args.append(msk)

    out_spec = pl.BlockSpec((1, C, 1), lambda b, t: (b, 0, 0))
    out_shape = tuple(jax.ShapeDtypeStruct((B, C, 1), jnp.float32)
                      for _ in range(3))

    inter_b, ssq_b, tsq_b = pl.pallas_call(
        kernel, out_shape=out_shape, grid=(B, n_tiles),
        in_specs=in_specs, out_specs=(out_spec,) * 3,
        compiler_params=pltpu.CompilerParams(
            dimension_semantics=("parallel", "arbitrary"),
            vmem_limit_bytes=32 * 1024 * 1024),
    )(*args)

    return (jnp.sum(inter_b, axis=(0, 2)), jnp.sum(ssq_b, axis=(0, 2)),
            jnp.sum(tsq_b, axis=(0, 2)))


# --------------------------------------------------------------------------
# Public entry point (mirrors DiceLoss.forward).
# --------------------------------------------------------------------------
def dice_loss(inputs, target, n_classes, mask=None, weight=None, softmax=False,
              max_rows_per_tile=None, max_tile_px=None, n_pixel_chunks=None,
              approx_recip=False):
    """Pallas implementation of DiceLoss.forward (inputs NCHW, target (B,1,H,W))."""
    B, C, H, W = inputs.shape
    assert C == n_classes, "predict and target shape do not match"
    HW = H * W

    msk = None
    if mask is not None:
        msk = mask
        if msk.dtype == jnp.bool_:
            msk = msk.astype(jnp.int8)

    if HW % 128 == 0:
        inter, ssq, tsq = _run_rows_path(inputs, target, msk, n_classes,
                                         softmax, approx_recip,
                                         max_rows_per_tile, n_pixel_chunks)
    else:
        inter, ssq, tsq = _run_flat_path(inputs, target, msk, n_classes,
                                         softmax, approx_recip, max_tile_px)

    # Tiny O(C) dice epilogue (matches _dice_loss / _dice_mask_loss exactly).
    smooth = 1e-10
    dice = (2.0 * inter + smooth) / (ssq + tsq + smooth)
    per_class_loss = 1.0 - dice
    if weight is None:
        w = jnp.ones((n_classes,), jnp.float32)
    else:
        w = jnp.asarray(weight, jnp.float32)
    return jnp.sum(per_class_loss * w) / n_classes


# --------------------------------------------------------------------------
# Pure-JAX reference (mirrors the PyTorch module) + validation.
# --------------------------------------------------------------------------
def _ref_dice_loss(inputs, target, n_classes, mask=None, weight=None,
                   softmax=False):
    if softmax:
        inputs = jax.nn.softmax(inputs, axis=1)
    one_hot = jnp.concatenate(
        [(target == i).astype(jnp.float32) for i in range(n_classes)], axis=1)
    if weight is None:
        weight = [1.0] * n_classes
    smooth = 1e-10
    loss = 0.0
    for i in range(n_classes):
        s = inputs[:, i].astype(jnp.float32)
        t = one_hot[:, i]
        if mask is None:
            inter = jnp.sum(s * t)
            union = jnp.sum(s * s) + jnp.sum(t * t)
        else:
            m = mask[:, 0].astype(jnp.float32)
            inter = jnp.sum(s * t * m)
            union = jnp.sum(s * s * m) + jnp.sum(t * t * m)
        d = (2.0 * inter + smooth) / (union + smooth)
        loss += (1.0 - d) * weight[i]
    return loss / n_classes


if __name__ == "__main__":
    n_classes = 4
    key = jax.random.PRNGKey(0)
    keys = jax.random.split(key, 12)
    wts = [1.0, 0.5, 2.0, 1.5]

    # 1/2) Rows fast path (HW % 128 == 0), single tile: unmasked and masked.
    B, H, W = 2, 16, 16
    logits = jax.random.normal(keys[0], (B, n_classes, H, W), jnp.float32)
    target = jax.random.randint(keys[1], (B, 1, H, W), 0, n_classes, jnp.int32)
    mask = (jax.random.uniform(keys[2], (B, 1, H, W)) > 0.3).astype(jnp.float32)

    loss = jax.block_until_ready(dice_loss(logits, target, n_classes,
                                           softmax=True))
    ref = _ref_dice_loss(logits, target, n_classes, softmax=True)
    assert jnp.allclose(loss, ref, rtol=1e-5, atol=1e-6), (loss, ref)

    loss_m = jax.block_until_ready(dice_loss(logits, target, n_classes,
                                             mask=mask, weight=wts,
                                             softmax=True))
    ref_m = _ref_dice_loss(logits, target, n_classes, mask=mask, weight=wts,
                           softmax=True)
    assert jnp.allclose(loss_m, ref_m, rtol=1e-5, atol=1e-6), (loss_m, ref_m)

    # 3) Rows path, multi-tile + pixel-chunk parallelism (B=1), masked.
    B2, H2, W2 = 1, 64, 64
    logits2 = jax.random.normal(keys[3], (B2, n_classes, H2, W2), jnp.float32)
    target2 = jax.random.randint(keys[4], (B2, 1, H2, W2), 0, n_classes,
                                 jnp.int32)
    mask2 = (jax.random.uniform(keys[5], (B2, 1, H2, W2)) > 0.3).astype(
        jnp.float32)
    loss_c = jax.block_until_ready(dice_loss(logits2, target2, n_classes,
                                             mask=mask2, weight=wts,
                                             softmax=True,
                                             max_rows_per_tile=8))
    ref_c = _ref_dice_loss(logits2, target2, n_classes, mask=mask2, weight=wts,
                           softmax=True)
    assert jnp.allclose(loss_c, ref_c, rtol=1e-5, atol=1e-6), (loss_c, ref_c)

    # 4) dtype contract: bf16 logits + int8 labels, cast in vregs.
    logits2_bf16 = logits2.astype(jnp.bfloat16)
    target2_i8 = target2.astype(jnp.int8)
    loss_b = jax.block_until_ready(dice_loss(logits2_bf16, target2_i8,
                                             n_classes, softmax=True,
                                             max_rows_per_tile=8))
    ref_b = _ref_dice_loss(logits2_bf16.astype(jnp.float32), target2_i8,
                           n_classes, softmax=True)
    assert jnp.allclose(loss_b, ref_b, rtol=1e-4, atol=1e-5), (loss_b, ref_b)

    # 5) Rows path with a ragged last row-tile (n_rows=18, forced 8-row tiles).
    B3, H3, W3 = 1, 48, 48
    logits3 = jax.random.normal(keys[6], (B3, n_classes, H3, W3), jnp.float32)
    target3 = jax.random.randint(keys[7], (B3, 1, H3, W3), 0, n_classes,
                                 jnp.int32)
    mask3 = (jax.random.uniform(keys[8], (B3, 1, H3, W3)) > 0.3).astype(
        jnp.float32)
    loss_r = jax.block_until_ready(dice_loss(logits3, target3, n_classes,
                                             mask=mask3, weight=wts,
                                             softmax=True,
                                             max_rows_per_tile=8))
    ref_r = _ref_dice_loss(logits3, target3, n_classes, mask=mask3, weight=wts,
                           softmax=True)
    assert jnp.allclose(loss_r, ref_r, rtol=1e-5, atol=1e-6), (loss_r, ref_r)

    # 6/7) Flat fallback (HW=324 not a multiple of 128), ragged last lane-tile.
    H4 = W4 = 18
    logits4 = jax.random.normal(keys[9], (2, n_classes, H4, W4), jnp.float32)
    target4 = jax.random.randint(keys[10], (2, 1, H4, W4), 0, n_classes,
                                 jnp.int32)
    mask4 = (jax.random.uniform(keys[11], (2, 1, H4, W4)) > 0.3).astype(
        jnp.float32)
    loss_f = jax.block_until_ready(dice_loss(logits4, target4, n_classes,
                                             mask=mask4, weight=wts,
                                             softmax=True, max_tile_px=128))
    ref_f = _ref_dice_loss(logits4, target4, n_classes, mask=mask4, weight=wts,
                           softmax=True)
    assert jnp.allclose(loss_f, ref_f, rtol=1e-5, atol=1e-6), (loss_f, ref_f)

    probs4 = jax.nn.softmax(logits4, axis=1)
    loss_u = jax.block_until_ready(dice_loss(probs4, target4, n_classes,
                                             softmax=False, max_tile_px=128))
    ref_u = _ref_dice_loss(probs4, target4, n_classes, softmax=False)
    assert jnp.allclose(loss_u, ref_u, rtol=1e-5, atol=1e-6), (loss_u, ref_u)

    print("KERNEL_OK")
</pallas_src>

<mosaic_0001>
module attributes {stable_mosaic.version = 11 : i64} {
  func.func @_dice_sums_rows_kernel(%arg0: i32, %arg1: i32, %arg2: i32, %arg3: memref<1x4x2x128xf32, #tpu.memory_space<vmem>>, %arg4: memref<1x1x2x128xi32, #tpu.memory_space<vmem>>, %arg5: memref<1x1x4x2x128xf32, #tpu.memory_space<vmem>>, %arg6: memref<1x1x4x2x128xf32, #tpu.memory_space<vmem>>, %arg7: memref<1x1x4x2x128xf32, #tpu.memory_space<vmem>>) attributes {dimension_semantics = [#tpu.dimension_semantics<parallel>, #tpu.dimension_semantics<parallel>, #tpu.dimension_semantics<arbitrary>], iteration_bounds = array<i64: 2, 1, 1>, scalar_prefetch = 0 : i64, scratch_operands = 0 : i64, tpu.core_type = #tpu.core_type<tc>, window_params = [{transform_indices = @transform_0, window_bounds = array<i64: 1, 4, 2, 128>}, {transform_indices = @transform_1, window_bounds = array<i64: 1, 1, 2, 128>}, {transform_indices = @transform_2, window_bounds = array<i64: 1, 1, 4, 2, 128>}, {transform_indices = @transform_3, window_bounds = array<i64: 1, 1, 4, 2, 128>}, {transform_indices = @transform_4, window_bounds = array<i64: 1, 1, 4, 2, 128>}]} {
    %c0_i32 = arith.constant 0 : i32
    %0 = arith.cmpi eq, %arg2, %c0_i32 : i32
    %1 = arith.extui %0 : i1 to i32
    %c0_i32_0 = arith.constant 0 : i32
    %2 = arith.cmpi ne, %1, %c0_i32_0 : i32
    scf.if %2 {
      %cst_141 = arith.constant 0.000000e+00 : f32
      %132 = vector.broadcast %cst_141 : f32 to vector<1x1x4x2x128xf32>
      %c0_142 = arith.constant 0 : index
      %c0_143 = arith.constant 0 : index
      %c0_144 = arith.constant 0 : index
      %c0_145 = arith.constant 0 : index
      %c0_146 = arith.constant 0 : index
      %133 = vector.load %arg5[%c0_142, %c0_143, %c0_144, %c0_145, %c0_146] : memref<1x1x4x2x128xf32, #tpu.memory_space<vmem>>, vector<1x1x4x2x128xf32>
      tpu.vector_store %arg5[%c0_142, %c0_143, %c0_144, %c0_145, %c0_146], %132 {strides = array<i32>} : memref<1x1x4x2x128xf32, #tpu.memory_space<vmem>>, vector<1x1x4x2x128xf32>,
      %cst_147 = arith.constant 0.000000e+00 : f32
      %134 = vector.broadcast %cst_147 : f32 to vector<1x1x4x2x128xf32>
      %c0_148 = arith.constant 0 : index
      %c0_149 = arith.constant 0 : index
      %c0_150 = arith.constant 0 : index
      %c0_151 = arith.constant 0 : index
      %c0_152 = arith.constant 0 : index
      %135 = vector.load %arg6[%c0_148, %c0_149, %c0_150, %c0_151, %c0_152] : memref<1x1x4x2x128xf32, #tpu.memory_space<vmem>>, vector<1x1x4x2x128xf32>
      tpu.vector_store %arg6[%c0_148, %c0_149, %c0_150, %c0_151, %c0_152], %134 {strides = array<i32>} : memref<1x1x4x2x128xf32, #tpu.memory_space<vmem>>, vector<1x1x4x2x128xf32>,
      %cst_153 = arith.constant 0.000000e+00 : f32
      %136 = vector.broadcast %cst_153 : f32 to vector<1x1x4x2x128xf32>
      %c0_154 = arith.constant 0 : index
      %c0_155 = arith.constant 0 : index
      %c0_156 = arith.constant 0 : index
      %c0_157 = arith.constant 0 : index
      %c0_158 = arith.constant 0 : index
      %137 = vector.load %arg7[%c0_154, %c0_155, %c0_156, %c0_157, %c0_158] : memref<1x1x4x2x128xf32, #tpu.memory_space<vmem>>, vector<1x1x4x2x128xf32>
      tpu.vector_store %arg7[%c0_154, %c0_155, %c0_156, %c0_157, %c0_158], %136 {strides = array<i32>} : memref<1x1x4x2x128xf32, #tpu.memory_space<vmem>>, vector<1x1x4x2x128xf32>,
    } else {
    }
    %c0 = arith.constant 0 : index
    %c0_1 = arith.constant 0 : index
    %c0_2 = arith.constant 0 : index
    %c0_3 = arith.constant 0 : index
    %3 = vector.load %arg4[%c0, %c0_1, %c0_2, %c0_3] : memref<1x1x2x128xi32, #tpu.memory_space<vmem>>, vector<1x1x2x128xi32>
    %4 = vector.shape_cast %3 : vector<1x1x2x128xi32> to vector<2x128xi32>
    %c0_4 = arith.constant 0 : index
    %c0_5 = arith.constant 0 : index
    %c0_6 = arith.constant 0 : index
    %c0_7 = arith.constant 0 : index
    %5 = vector.load %arg3[%c0_4, %c0_5, %c0_6, %c0_7] : memref<1x4x2x128xf32, #tpu.memory_space<vmem>>, vector<1x1x2x128xf32>
    %6 = vector.shape_cast %5 : vector<1x1x2x128xf32> to vector<2x128xf32>
    %c0_8 = arith.constant 0 : index
    %c1 = arith.constant 1 : index
    %c0_9 = arith.constant 0 : index
    %c0_10 = arith.constant 0 : index
    %7 = vector.load %arg3[%c0_8, %c1, %c0_9, %c0_10] : memref<1x4x2x128xf32, #tpu.memory_space<vmem>>, vector<1x1x2x128xf32>
    %8 = vector.shape_cast %7 : vector<1x1x2x128xf32> to vector<2x128xf32>
    %c0_11 = arith.constant 0 : index
    %c2 = arith.constant 2 : index
    %c0_12 = arith.constant 0 : index
    %c0_13 = arith.constant 0 : index
    %9 = vector.load %arg3[%c0_11, %c2, %c0_12, %c0_13] : memref<1x4x2x128xf32, #tpu.memory_space<vmem>>, vector<1x1x2x128xf32>
    %10 = vector.shape_cast %9 : vector<1x1x2x128xf32> to vector<2x128xf32>
    %c0_14 = arith.constant 0 : index
    %c3 = arith.constant 3 : index
    %c0_15 = arith.constant 0 : index
    %c0_16 = arith.constant 0 : index
    %11 = vector.load %arg3[%c0_14, %c3, %c0_15, %c0_16] : memref<1x4x2x128xf32, #tpu.memory_space<vmem>>, vector<1x1x2x128xf32>
    %12 = vector.shape_cast %11 : vector<1x1x2x128xf32> to vector<2x128xf32>
    %13 = arith.maximumf %6, %8 : vector<2x128xf32>
    %14 = arith.maximumf %13, %10 : vector<2x128xf32>
    %15 = arith.maximumf %14, %12 : vector<2x128xf32>
    %16 = arith.subf %6, %15 : vector<2x128xf32>
    %17 = math.exp %16 : vector<2x128xf32>
    %18 = arith.subf %8, %15 : vector<2x128xf32>
    %19 = math.exp %18 : vector<2x128xf32>
    %20 = arith.subf %10, %15 : vector<2x128xf32>
    %21 = math.exp %20 : vector<2x128xf32>
    %22 = arith.subf %12, %15 : vector<2x128xf32>
    %23 = math.exp %22 : vector<2x128xf32>
    %24 = arith.addf %17, %19 : vector<2x128xf32>
    %25 = arith.addf %24, %21 : vector<2x128xf32>
    %26 = arith.addf %25, %23 : vector<2x128xf32>
    %27 = tpu.reciprocal %26 : vector<2x128xf32> -> vector<2x128xf32>
    %28 = arith.mulf %17, %27 : vector<2x128xf32>
    %29 = arith.mulf %19, %27 : vector<2x128xf32>
    %30 = arith.mulf %21, %27 : vector<2x128xf32>
    %31 = arith.mulf %23, %27 : vector<2x128xf32>
    %c0_i32_17 = arith.constant 0 : i32
    %32 = vector.broadcast %c0_i32_17 : i32 to vector<2x128xi32>
    %33 = arith.cmpi eq, %4, %32 : vector<2x128xi32>
    %cst = arith.constant 0.000000e+00 : f32
    %34 = vector.broadcast %cst : f32 to vector<2x128xf32>
    %35 = arith.select %33, %28, %34 : vector<2x128xi1>, vector<2x128xf32>
    %36 = arith.mulf %28, %28 : vector<2x128xf32>
    %37 = arith.extui %33 : vector<2x128xi1> to vector<2x128xi32>
    %38 = arith.sitofp %37 : vector<2x128xi32> to vector<2x128xf32>
    %c0_18 = arith.constant 0 : index
    %c0_19 = arith.constant 0 : index
    %c0_20 = arith.constant 0 : index
    %c0_21 = arith.constant 0 : index
    %c0_22 = arith.constant 0 : index
    %39 = vector.load %arg5[%c0_18, %c0_19, %c0_20, %c0_21, %c0_22] : memref<1x1x4x2x128xf32, #tpu.memory_space<vmem>>, vector<1x1x1x2x128xf32>
    %40 = vector.shape_cast %39 : vector<1x1x1x2x128xf32> to vector<2x128xf32>
    %41 = arith.addf %40, %35 : vector<2x128xf32>
    %c0_23 = arith.constant 0 : index
    %c0_24 = arith.constant 0 : index
    %c0_25 = arith.constant 0 : index
    %c0_26 = arith.constant 0 : index
    %c0_27 = arith.constant 0 : index
    %42 = vector.load %arg5[%c0_23, %c0_24, %c0_25, %c0_26, %c0_27] : memref<1x1x4x2x128xf32, #tpu.memory_space<vmem>>, vector<1x1x1x2x128xf32>
    %43 = vector.shape_cast %42 : vector<1x1x1x2x128xf32> to vector<2x128xf32>
    %44 = vector.shape_cast %41 : vector<2x128xf32> to vector<1x1x1x2x128xf32>
    tpu.vector_store %arg5[%c0_23, %c0_24, %c0_25, %c0_26, %c0_27], %44 {strides = array<i32>} : memref<1x1x4x2x128xf32, #tpu.memory_space<vmem>>, vector<1x1x1x2x128xf32>,
    %c0_28 = arith.constant 0 : index
    %c0_29 = arith.constant 0 : index
    %c0_30 = arith.constant 0 : index
    %c0_31 = arith.constant 0 : index
    %c0_32 = arith.constant 0 : index
    %45 = vector.load %arg6[%c0_28, %c0_29, %c0_30, %c0_31, %c0_32] : memref<1x1x4x2x128xf32, #tpu.memory_space<vmem>>, vector<1x1x1x2x128xf32>
    %46 = vector.shape_cast %45 : vector<1x1x1x2x128xf32> to vector<2x128xf32>
    %47 = arith.addf %46, %36 : vector<2x128xf32>
    %c0_33 = arith.constant 0 : index
    %c0_34 = arith.constant 0 : index
    %c0_35 = arith.constant 0 : index
    %c0_36 = arith.constant 0 : index
    %c0_37 = arith.constant 0 : index
    %48 = vector.load %arg6[%c0_33, %c0_34, %c0_35, %c0_36, %c0_37] : memref<1x1x4x2x128xf32, #tpu.memory_space<vmem>>, vector<1x1x1x2x128xf32>
    %49 = vector.shape_cast %48 : vector<1x1x1x2x128xf32> to vector<2x128xf32>
    %50 = vector.shape_cast %47 : vector<2x128xf32> to vector<1x1x1x2x128xf32>
    tpu.vector_store %arg6[%c0_33, %c0_34, %c0_35, %c0_36, %c0_37], %50 {strides = array<i32>} : memref<1x1x4x2x128xf32, #tpu.memory_space<vmem>>, vector<1x1x1x2x128xf32>,
    %c0_38 = arith.constant 0 : index
    %c0_39 = arith.constant 0 : index
    %c0_40 = arith.constant 0 : index
    %c0_41 = arith.constant 0 : index
    %c0_42 = arith.constant 0 : index
    %51 = vector.load %arg7[%c0_38, %c0_39, %c0_40, %c0_41, %c0_42] : memref<1x1x4x2x128xf32, #tpu.memory_space<vmem>>, vector<1x1x1x2x128xf32>
    %52 = vector.shape_cast %51 : vector<1x1x1x2x128xf32> to vector<2x128xf32>
    %53 = arith.addf %52, %38 : vector<2x128xf32>
    %c0_43 = arith.constant 0 : index
    %c0_44 = arith.constant 0 : index
    %c0_45 = arith.constant 0 : index
    %c0_46 = arith.constant 0 : index
    %c0_47 = arith.constant 0 : index
    %54 = vector.load %arg7[%c0_43, %c0_44, %c0_45, %c0_46, %c0_47] : memref<1x1x4x2x128xf32, #tpu.memory_space<vmem>>, vector<1x1x1x2x128xf32>
    %55 = vector.shape_cast %54 : vector<1x1x1x2x128xf32> to vector<2x128xf32>
    %56 = vector.shape_cast %53 : vector<2x128xf32> to vector<1x1x1x2x128xf32>
    tpu.vector_store %arg7[%c0_43, %c0_44, %c0_45, %c0_46, %c0_47], %56 {strides = array<i32>} : memref<1x1x4x2x128xf32, #tpu.memory_space<vmem>>, vector<1x1x1x2x128xf32>,
    %c1_i32 = arith.constant 1 : i32
    %57 = vector.broadcast %c1_i32 : i32 to vector<2x128xi32>
    %58 = arith.cmpi eq, %4, %57 : vector<2x128xi32>
    %cst_48 = arith.constant 0.000000e+00 : f32
    %59 = vector.broadcast %cst_48 : f32 to vector<2x128xf32>
    %60 = arith.select %58, %29, %59 : vector<2x128xi1>, vector<2x128xf32>
    %61 = arith.mulf %29, %29 : vector<2x128xf32>
    %62 = arith.extui %58 : vector<2x128xi1> to vector<2x128xi32>
    %63 = arith.sitofp %62 : vector<2x128xi32> to vector<2x128xf32>
    %c0_49 = arith.constant 0 : index
    %c0_50 = arith.constant 0 : index
    %c1_51 = arith.constant 1 : index
    %c0_52 = arith.constant 0 : index
    %c0_53 = arith.constant 0 : index
    %64 = vector.load %arg5[%c0_49, %c0_50, %c1_51, %c0_52, %c0_53] : memref<1x1x4x2x128xf32, #tpu.memory_space<vmem>>, vector<1x1x1x2x128xf32>
    %65 = vector.shape_cast %64 : vector<1x1x1x2x128xf32> to vector<2x128xf32>
    %66 = arith.addf %65, %60 : vector<2x128xf32>
    %c0_54 = arith.constant 0 : index
    %c0_55 = arith.constant 0 : index
    %c1_56 = arith.constant 1 : index
    %c0_57 = arith.constant 0 : index
    %c0_58 = arith.constant 0 : index
    %67 = vector.load %arg5[%c0_54, %c0_55, %c1_56, %c0_57, %c0_58] : memref<1x1x4x2x128xf32, #tpu.memory_space<vmem>>, vector<1x1x1x2x128xf32>
    %68 = vector.shape_cast %67 : vector<1x1x1x2x128xf32> to vector<2x128xf32>
    %69 = vector.shape_cast %66 : vector<2x128xf32> to vector<1x1x1x2x128xf32>
    tpu.vector_store %arg5[%c0_54, %c0_55, %c1_56, %c0_57, %c0_58], %69 {strides = array<i32>} : memref<1x1x4x2x128xf32, #tpu.memory_space<vmem>>, vector<1x1x1x2x128xf32>,
    %c0_59 = arith.constant 0 : index
    %c0_60 = arith.constant 0 : index
    %c1_61 = arith.constant 1 : index
    %c0_62 = arith.constant 0 : index
    %c0_63 = arith.constant 0 : index
    %70 = vector.load %arg6[%c0_59, %c0_60, %c1_61, %c0_62, %c0_63] : memref<1x1x4x2x128xf32, #tpu.memory_space<vmem>>, vector<1x1x1x2x128xf32>
    %71 = vector.shape_cast %70 : vector<1x1x1x2x128xf32> to vector<2x128xf32>
    %72 = arith.addf %71, %61 : vector<2x128xf32>
    %c0_64 = arith.constant 0 : index
    %c0_65 = arith.constant 0 : index
    %c1_66 = arith.constant 1 : index
    %c0_67 = arith.constant 0 : index
    %c0_68 = arith.constant 0 : index
    %73 = vector.load %arg6[%c0_64, %c0_65, %c1_66, %c0_67, %c0_68] : memref<1x1x4x2x128xf32, #tpu.memory_space<vmem>>, vector<1x1x1x2x128xf32>
    %74 = vector.shape_cast %73 : vector<1x1x1x2x128xf32> to vector<2x128xf32>
    %75 = vector.shape_cast %72 : vector<2x128xf32> to vector<1x1x1x2x128xf32>
    tpu.vector_store %arg6[%c0_64, %c0_65, %c1_66, %c0_67, %c0_68], %75 {strides = array<i32>} : memref<1x1x4x2x128xf32, #tpu.memory_space<vmem>>, vector<1x1x1x2x128xf32>,
    %c0_69 = arith.constant 0 : index
    %c0_70 = arith.constant 0 : index
    %c1_71 = arith.constant 1 : index
    %c0_72 = arith.constant 0 : index
    %c0_73 = arith.constant 0 : index
    %76 = vector.load %arg7[%c0_69, %c0_70, %c1_71, %c0_72, %c0_73] : memref<1x1x4x2x128xf32, #tpu.memory_space<vmem>>, vector<1x1x1x2x128xf32>
    %77 = vector.shape_cast %76 : vector<1x1x1x2x128xf32> to vector<2x128xf32>
    %78 = arith.addf %77, %63 : vector<2x128xf32>
    %c0_74 = arith.constant 0 : index
    %c0_75 = arith.constant 0 : index
    %c1_76 = arith.constant 1 : index
    %c0_77 = arith.constant 0 : index
    %c0_78 = arith.constant 0 : index
    %79 = vector.load %arg7[%c0_74, %c0_75, %c1_76, %c0_77, %c0_78] : memref<1x1x4x2x128xf32, #tpu.memory_space<vmem>>, vector<1x1x1x2x128xf32>
    %80 = vector.shape_cast %79 : vector<1x1x1x2x128xf32> to vector<2x128xf32>
    %81 = vector.shape_cast %78 : vector<2x128xf32> to vector<1x1x1x2x128xf32>
    tpu.vector_store %arg7[%c0_74, %c0_75, %c1_76, %c0_77, %c0_78], %81 {strides = array<i32>} : memref<1x1x4x2x128xf32, #tpu.memory_space<vmem>>, vector<1x1x1x2x128xf32>,
    %c2_i32 = arith.constant 2 : i32
    %82 = vector.broadcast %c2_i32 : i32 to vector<2x128xi32>
    %83 = arith.cmpi eq, %4, %82 : vector<2x128xi32>
    %cst_79 = arith.constant 0.000000e+00 : f32
    %84 = vector.broadcast %cst_79 : f32 to vector<2x128xf32>
    %85 = arith.select %83, %30, %84 : vector<2x128xi1>, vector<2x128xf32>
    %86 = arith.mulf %30, %30 : vector<2x128xf32>
    %87 = arith.extui %83 : vector<2x128xi1> to vector<2x128xi32>
    %88 = arith.sitofp %87 : vector<2x128xi32> to vector<2x128xf32>
    %c0_80 = arith.constant 0 : index
    %c0_81 = arith.constant 0 : index
    %c2_82 = arith.constant 2 : index
    %c0_83 = arith.constant 0 : index
    %c0_84 = arith.constant 0 : index
    %89 = vector.load %arg5[%c0_80, %c0_81, %c2_82, %c0_83, %c0_84] : memref<1x1x4x2x128xf32, #tpu.memory_space<vmem>>, vector<1x1x1x2x128xf32>
    %90 = vector.shape_cast %89 : vector<1x1x1x2x128xf32> to vector<2x128xf32>
    %91 = arith.addf %90, %85 : vector<2x128xf32>
    %c0_85 = arith.constant 0 : index
    %c0_86 = arith.constant 0 : index
    %c2_87 = arith.constant 2 : index
    %c0_88 = arith.constant 0 : index
    %c0_89 = arith.constant 0 : index
    %92 = vector.load %arg5[%c0_85, %c0_86, %c2_87, %c0_88, %c0_89] : memref<1x1x4x2x128xf32, #tpu.memory_space<vmem>>, vector<1x1x1x2x128xf32>
    %93 = vector.shape_cast %92 : vector<1x1x1x2x128xf32> to vector<2x128xf32>
    %94 = vector.shape_cast %91 : vector<2x128xf32> to vector<1x1x1x2x128xf32>
    tpu.vector_store %arg5[%c0_85, %c0_86, %c2_87, %c0_88, %c0_89], %94 {strides = array<i32>} : memref<1x1x4x2x128xf32, #tpu.memory_space<vmem>>, vector<1x1x1x2x128xf32>,
    %c0_90 = arith.constant 0 : index
    %c0_91 = arith.constant 0 : index
    %c2_92 = arith.constant 2 : index
    %c0_93 = arith.constant 0 : index
    %c0_94 = arith.constant 0 : index
    %95 = vector.load %arg6[%c0_90, %c0_91, %c2_92, %c0_93, %c0_94] : memref<1x1x4x2x128xf32, #tpu.memory_space<vmem>>, vector<1x1x1x2x128xf32>
    %96 = vector.shape_cast %95 : vector<1x1x1x2x128xf32> to vector<2x128xf32>
    %97 = arith.addf %96, %86 : vector<2x128xf32>
    %c0_95 = arith.constant 0 : index
    %c0_96 = arith.constant 0 : index
    %c2_97 = arith.constant 2 : index
    %c0_98 = arith.constant 0 : index
    %c0_99 = arith.constant 0 : index
    %98 = vector.load %arg6[%c0_95, %c0_96, %c2_97, %c0_98, %c0_99] : memref<1x1x4x2x128xf32, #tpu.memory_space<vmem>>, vector<1x1x1x2x128xf32>
    %99 = vector.shape_cast %98 : vector<1x1x1x2x128xf32> to vector<2x128xf32>
    %100 = vector.shape_cast %97 : vector<2x128xf32> to vector<1x1x1x2x128xf32>
    tpu.vector_store %arg6[%c0_95, %c0_96, %c2_97, %c0_98, %c0_99], %100 {strides = array<i32>} : memref<1x1x4x2x128xf32, #tpu.memory_space<vmem>>, vector<1x1x1x2x128xf32>,
    %c0_100 = arith.constant 0 : index
    %c0_101 = arith.constant 0 : index
    %c2_102 = arith.constant 2 : index
    %c0_103 = arith.constant 0 : index
    %c0_104 = arith.constant 0 : index
    %101 = vector.load %arg7[%c0_100, %c0_101, %c2_102, %c0_103, %c0_104] : memref<1x1x4x2x128xf32, #tpu.memory_space<vmem>>, vector<1x1x1x2x128xf32>
    %102 = vector.shape_cast %101 : vector<1x1x1x2x128xf32> to vector<2x128xf32>
    %103 = arith.addf %102, %88 : vector<2x128xf32>
    %c0_105 = arith.constant 0 : index
    %c0_106 = arith.constant 0 : index
    %c2_107 = arith.constant 2 : index
    %c0_108 = arith.constant 0 : index
    %c0_109 = arith.constant 0 : index
    %104 = vector.load %arg7[%c0_105, %c0_106, %c2_107, %c0_108, %c0_109] : memref<1x1x4x2x128xf32, #tpu.memory_space<vmem>>, vector<1x1x1x2x128xf32>
    %105 = vector.shape_cast %104 : vector<1x1x1x2x128xf32> to vector<2x128xf32>
    %106 = vector.shape_cast %103 : vector<2x128xf32> to vector<1x1x1x2x128xf32>
    tpu.vector_store %arg7[%c0_105, %c0_106, %c2_107, %c0_108, %c0_109], %106 {strides = array<i32>} : memref<1x1x4x2x128xf32, #tpu.memory_space<vmem>>, vector<1x1x1x2x128xf32>,
    %c3_i32 = arith.constant 3 : i32
    %107 = vector.broadcast %c3_i32 : i32 to vector<2x128xi32>
    %108 = arith.cmpi eq, %4, %107 : vector<2x128xi32>
    %cst_110 = arith.constant 0.000000e+00 : f32
    %109 = vector.broadcast %cst_110 : f32 to vector<2x128xf32>
    %110 = arith.select %108, %31, %109 : vector<2x128xi1>, vector<2x128xf32>
    %111 = arith.mulf %31, %31 : vector<2x128xf32>
    %112 = arith.extui %108 : vector<2x128xi1> to vector<2x128xi32>
    %113 = arith.sitofp %112 : vector<2x128xi32> to vector<2x128xf32>
    %c0_111 = arith.constant 0 : index
    %c0_112 = arith.constant 0 : index
    %c3_113 = arith.constant 3 : index
    %c0_114 = arith.constant 0 : index
    %c0_115 = arith.constant 0 : index
    %114 = vector.load %arg5[%c0_111, %c0_112, %c3_113, %c0_114, %c0_115] : memref<1x1x4x2x128xf32, #tpu.memory_space<vmem>>, vector<1x1x1x2x128xf32>
    %115 = vector.shape_cast %114 : vector<1x1x1x2x128xf32> to vector<2x128xf32>
    %116 = arith.addf %115, %110 : vector<2x128xf32>
    %c0_116 = arith.constant 0 : index
    %c0_117 = arith.constant 0 : index
    %c3_118 = arith.constant 3 : index
    %c0_119 = arith.constant 0 : index
    %c0_120 = arith.constant 0 : index
    %117 = vector.load %arg5[%c0_116, %c0_117, %c3_118, %c0_119, %c0_120] : memref<1x1x4x2x128xf32, #tpu.memory_space<vmem>>, vector<1x1x1x2x128xf32>
    %118 = vector.shape_cast %117 : vector<1x1x1x2x128xf32> to vector<2x128xf32>
    %119 = vector.shape_cast %116 : vector<2x128xf32> to vector<1x1x1x2x128xf32>
    tpu.vector_store %arg5[%c0_116, %c0_117, %c3_118, %c0_119, %c0_120], %119 {strides = array<i32>} : memref<1x1x4x2x128xf32, #tpu.memory_space<vmem>>, vector<1x1x1x2x128xf32>,
    %c0_121 = arith.constant 0 : index
    %c0_122 = arith.constant 0 : index
    %c3_123 = arith.constant 3 : index
    %c0_124 = arith.constant 0 : index
    %c0_125 = arith.constant 0 : index
    %120 = vector.load %arg6[%c0_121, %c0_122, %c3_123, %c0_124, %c0_125] : memref<1x1x4x2x128xf32, #tpu.memory_space<vmem>>, vector<1x1x1x2x128xf32>
    %121 = vector.shape_cast %120 : vector<1x1x1x2x128xf32> to vector<2x128xf32>
    %122 = arith.addf %121, %111 : vector<2x128xf32>
    %c0_126 = arith.constant 0 : index
    %c0_127 = arith.constant 0 : index
    %c3_128 = arith.constant 3 : index
    %c0_129 = arith.constant 0 : index
    %c0_130 = arith.constant 0 : index
    %123 = vector.load %arg6[%c0_126, %c0_127, %c3_128, %c0_129, %c0_130] : memref<1x1x4x2x128xf32, #tpu.memory_space<vmem>>, vector<1x1x1x2x128xf32>
    %124 = vector.shape_cast %123 : vector<1x1x1x2x128xf32> to vector<2x128xf32>
    %125 = vector.shape_cast %122 : vector<2x128xf32> to vector<1x1x1x2x128xf32>
    tpu.vector_store %arg6[%c0_126, %c0_127, %c3_128, %c0_129, %c0_130], %125 {strides = array<i32>} : memref<1x1x4x2x128xf32, #tpu.memory_space<vmem>>, vector<1x1x1x2x128xf32>,
    %c0_131 = arith.constant 0 : index
    %c0_132 = arith.constant 0 : index
    %c3_133 = arith.constant 3 : index
    %c0_134 = arith.constant 0 : index
    %c0_135 = arith.constant 0 : index
    %126 = vector.load %arg7[%c0_131, %c0_132, %c3_133, %c0_134, %c0_135] : memref<1x1x4x2x128xf32, #tpu.memory_space<vmem>>, vector<1x1x1x2x128xf32>
    %127 = vector.shape_cast %126 : vector<1x1x1x2x128xf32> to vector<2x128xf32>
    %128 = arith.addf %127, %113 : vector<2x128xf32>
    %c0_136 = arith.constant 0 : index
    %c0_137 = arith.constant 0 : index
    %c3_138 = arith.constant 3 : index
    %c0_139 = arith.constant 0 : index
    %c0_140 = arith.constant 0 : index
    %129 = vector.load %arg7[%c0_136, %c0_137, %c3_138, %c0_139, %c0_140] : memref<1x1x4x2x128xf32, #tpu.memory_space<vmem>>, vector<1x1x1x2x128xf32>
    %130 = vector.shape_cast %129 : vector<1x1x1x2x128xf32> to vector<2x128xf32>
    %131 = vector.shape_cast %128 : vector<2x128xf32> to vector<1x1x1x2x128xf32>
    tpu.vector_store %arg7[%c0_136, %c0_137, %c3_138, %c0_139, %c0_140], %131 {strides = array<i32>} : memref<1x1x4x2x128xf32, #tpu.memory_space<vmem>>, vector<1x1x1x2x128xf32>,
    return
  }
  func.func @transform_0(%arg0: i32, %arg1: i32, %arg2: i32) -> (i32, i32, i32, i32) {
    %c1_i32 = arith.constant 1 : i32
    %0 = arith.muli %arg1, %c1_i32 : i32
    %1 = arith.addi %0, %arg2 : i32
    %c0_i32 = arith.constant 0 : i32
    %c0_i32_0 = arith.constant 0 : i32
    %c0_i32_1 = arith.constant 0 : i32
    return %arg0, %c0_i32, %1, %c0_i32_0 : i32, i32, i32, i32
  }
  func.func @transform_1(%arg0: i32, %arg1: i32, %arg2: i32) -> (i32, i32, i32, i32) {
    %c1_i32 = arith.constant 1 : i32
    %0 = arith.muli %arg1, %c1_i32 : i32
    %1 = arith.addi %0, %arg2 : i32
    %c0_i32 = arith.constant 0 : i32
    %c0_i32_0 = arith.constant 0 : i32
    %c0_i32_1 = arith.constant 0 : i32
    return %arg0, %c0_i32, %1, %c0_i32_0 : i32, i32, i32, i32
  }
  func.func @transform_2(%arg0: i32, %arg1: i32, %arg2: i32) -> (i32, i32, i32, i32, i32) {
    %c0_i32 = arith.constant 0 : i32
    %c0_i32_0 = arith.constant 0 : i32
    %c0_i32_1 = arith.constant 0 : i32
    %c0_i32_2 = arith.constant 0 : i32
    return %arg0, %arg1, %c0_i32, %c0_i32_0, %c0_i32_1 : i32, i32, i32, i32, i32
  }
  func.func @transform_3(%arg0: i32, %arg1: i32, %arg2: i32) -> (i32, i32, i32, i32, i32) {
    %c0_i32 = arith.constant 0 : i32
    %c0_i32_0 = arith.constant 0 : i32
    %c0_i32_1 = arith.constant 0 : i32
    %c0_i32_2 = arith.constant 0 : i32
    return %arg0, %arg1, %c0_i32, %c0_i32_0, %c0_i32_1 : i32, i32, i32, i32, i32
  }
  func.func @transform_4(%arg0: i32, %arg1: i32, %arg2: i32) -> (i32, i32, i32, i32, i32) {
    %c0_i32 = arith.constant 0 : i32
    %c0_i32_0 = arith.constant 0 : i32
    %c0_i32_1 = arith.constant 0 : i32
    %c0_i32_2 = arith.constant 0 : i32
    return %arg0, %arg1, %c0_i32, %c0_i32_0, %c0_i32_1 : i32, i32, i32, i32, i32
  }
}

</mosaic_0001>

<llo_original>
// kernel: tpu_custom_call.1
$region0: #{tpu_custom_call.1}
  #allocation0 [shape = 'u32[]', space=smem, size = 0x4, offset = 0x4, fixed_abs, tag = 'smem constant byte address 0x4 - core index']
  #allocation1 [shape = 'u32[144,128]{1,0:T(1,128)}', space=vmem, size = 0x12000, scoped, tag = 'internal scratch']
  %s0 = inlined_call_operand.hbm [shape: f32[2,4,2,128], index: 0, kind: input, shape index: {}]
  %s1 = inlined_call_operand.hbm [shape: s32[2,1,2,128], index: 1, kind: input, shape index: {}]
  %s2 = inlined_call_operand.hbm [shape: f32[2,1,4,2,128], index: 2, kind: output, shape index: {0}]
  %s3 = inlined_call_operand.hbm [shape: f32[2,1,4,2,128], index: 3, kind: output, shape index: {1}]
  %s4 = inlined_call_operand.hbm [shape: f32[2,1,4,2,128], index: 4, kind: output, shape index: {2}]
  %5 = xla_tuple %s2, %s3, %s4
  %s6 = sld [smem:[#allocation0]]
  $region69: #{tpu_custom_call.1} parent=0
    _
  %s8 = ssub.s32 1, %s6
  %s9 = scalar_select 0, %s8, %s6
  $region1: #{tpu_custom_call.1} parent=0
    #allocation2 [shape = 'u8[8192]{0}', space=vmem, size = 0x2000, scoped, tag = 'input window, operand 0']
    #allocation3 [shape = 's32[2]{0}', space=sflag, size = 0x8, scoped, tag = 'scoped memory for tpu_custom_call.1']
    #allocation4 [shape = 's32[2]{0}', space=sflag, size = 0x8, scoped, tag = 'scoped memory for tpu_custom_call.1']
    #allocation5 [shape = 'u8[2048]{0}', space=vmem, size = 0x800, scoped, tag = 'input window, operand 1']
    #allocation6 [shape = 's32[2]{0}', space=sflag, size = 0x8, scoped, tag = 'scoped memory for tpu_custom_call.1']
    #allocation7 [shape = 'u8[8192]{0}', space=vmem, size = 0x2000, scoped, tag = 'output window, operand 0']
    #allocation8 [shape = 'u8[8192]{0}', space=vmem, size = 0x2000, scoped, tag = 'output window, operand 1']
    #allocation9 [shape = 's32[2]{0}', space=sflag, size = 0x8, scoped, tag = 'scoped memory for tpu_custom_call.1']
    #allocation10 [shape = 'u8[8192]{0}', space=vmem, size = 0x2000, scoped, tag = 'output window, operand 2']
    %10 = vsyncpa [#allocation3], 0
    %s11 = scalar_lea.sflag [#allocation3], 1
    %12 = vsyncpa %s11, 0
    %13 = vsyncpa [#allocation6], 0
    %s14 = scalar_lea.sflag [#allocation6], 1
    %15 = vsyncpa %s14, 0
    %16 = vsyncpa [#allocation4], 0
    %s17 = scalar_lea.sflag [#allocation4], 1
    %18 = vsyncpa %s17, 0
    %19 = vsyncpa [#allocation9], 0
    %s20 = scalar_lea.sflag [#allocation9], 1
    %21 = vsyncpa %s20, 0
    loop: start=0, step=1, limit=4
    $region2: #{tpu_custom_call.1} parent=1 // loop_pre_header
      _
    $region3: #{tpu_custom_call.1} parent=1 // loop_header
      %s23 = sphi 0, %s27
      %p24 = scmp.ge.s32.totalorder %s23, 4
      %s30 = sphi 0, %s49
      %s31 = sphi 0, %s45
      %s32 = sphi 0, %s41
      %s33 = sphi 0, %s30
      %s34 = sphi 0, %s31
      %s35 = sphi 0, %s32
      %s36 = sphi 0, %s33
      %s37 = sphi 0, %s34
      %s38 = sphi 0, %s35
      %s56 = sphi 0, %s58
      %s59 = sphi 0, %s56
      %s60 = sphi 0, %s59
      %s76 = sphi 0, %s60
      %s86 = sphi 0, %s88
      %s89 = sphi 0, %s86
      %s90 = sphi 0, %s89
      %s106 = sphi 0, %s90
      %s114 = sphi 0, %s116
      %s117 = sphi 0, %s114
      %s118 = sphi 0, %s117
      %s134 = sphi 0, %s118
      %s142 = sphi 0, %s144
      %s145 = sphi 0, %s142
      %s146 = sphi 0, %s145
      %s162 = sphi 0, %s146
      %s170 = sphi 0, %s172
      %s173 = sphi 0, %s170
      %s174 = sphi 0, %s173
      %s190 = sphi 0, %s174
    $region4: #{tpu_custom_call.1} parent=1 // loop_header_branch
      %26 = sbr.rel (%p24) target = $region8
    $region5: #{tpu_custom_call.1} parent=1 // loop_body
      %s28 = ssub.s32 %s23, 1
      %s29 = ssub.s32 %s23, 2
      %s39 = sadd.s32 1, %s32
      %p40 = scmp.ge.s32.totalorder %s39, 1
      %s41 = scalar_select %p40, 0, %s39
      %s42 = sadd.s32 1, %s31
      %s43 = scalar_select %p40, %s42, %s31
      %p44 = scmp.ge.s32.totalorder %s43, 1
      %s45 = scalar_select %p44, 0, %s43
      %s46 = sadd.s32 1, %s30
      %s47 = scalar_select %p44, %s46, %s30
      %p48 = scmp.ge.s32.totalorder %s47, 2
      %s49 = scalar_select %p48, 0, %s47
      %s50 = sadd.s32 %s31, %s32
      %s51 = sadd.s32 %s45, %s41
      %s52 = ssub.s32 %s30, %s49
      %s53 = ssub.s32 %s50, %s51
      %s54 = sor.u32 %s52, %s53
      %p55 = scmp.eq.s32.totalorder %s54, 0
      %s57 = sadd.s32 %s56, 1
      %s58 = scalar_select %p55, %s56, %s57
      %p61 = pneg %p55
      %p62 = scmp.eq.s32.totalorder %s23, 1
      %p63 = por %p61, %p62
      %p64 = scmp.ne.s32.totalorder %s56, %s59
      %p65 = scmp.eq.s32.totalorder %s23, 0
      %p66 = por %p64, %p65
      %p67 = scmp.ne.s32.totalorder %s56, %s59
      %p68 = scmp.eq.s32.totalorder %s28, 1
      %p69 = por %p67, %p68
      %p70 = scmp.ne.s32.totalorder %s59, %s60
      %p71 = scmp.eq.s32.totalorder %s28, 0
      %p72 = por %p70, %p71
      %p73 = scmp.ne.s32.totalorder %s59, %s60
      %p74 = scmp.eq.s32.totalorder %s29, 1
      %p75 = por %p73, %p74
      %p77 = scmp.ne.s32.totalorder %s60, %s76
      %p78 = scmp.eq.s32.totalorder %s29, 0
      %p79 = por %p77, %p78
      %s80 = sadd.s32 %s31, %s32
      %s81 = sadd.s32 %s45, %s41
      %s82 = ssub.s32 %s30, %s49
      %s83 = ssub.s32 %s80, %s81
      %s84 = sor.u32 %s82, %s83
      %p85 = scmp.eq.s32.totalorder %s84, 0
      %s87 = sadd.s32 %s86, 1
      %s88 = scalar_select %p85, %s86, %s87
      %p91 = pneg %p85
      %p92 = scmp.eq.s32.totalorder %s23, 1
      %p93 = por %p91, %p92
      %p94 = scmp.ne.s32.totalorder %s86, %s89
      %p95 = scmp.eq.s32.totalorder %s23, 0
      %p96 = por %p94, %p95
      %p97 = scmp.ne.s32.totalorder %s86, %s89
      %p98 = scmp.eq.s32.totalorder %s28, 1
      %p99 = por %p97, %p98
      %p100 = scmp.ne.s32.totalorder %s89, %s90
      %p101 = scmp.eq.s32.totalorder %s28, 0
      %p102 = por %p100, %p101
      %p103 = scmp.ne.s32.totalorder %s89, %s90
      %p104 = scmp.eq.s32.totalorder %s29, 1
      %p105 = por %p103, %p104
      %p107 = scmp.ne.s32.totalorder %s90, %s106
      %p108 = scmp.eq.s32.totalorder %s29, 0
      %p109 = por %p107, %p108
      %s110 = ssub.s32 %s30, %s49
      %s111 = ssub.s32 %s31, %s45
      %s112 = sor.u32 %s110, %s111
      %p113 = scmp.eq.s32.totalorder %s112, 0
      %s115 = sadd.s32 %s114, 1
      %s116 = scalar_select %p113, %s114, %s115
      %p119 = pneg %p113
      %p120 = scmp.eq.s32.totalorder %s23, 1
      %p121 = por %p119, %p120
      %p122 = scmp.ne.s32.totalorder %s114, %s117
      %p123 = scmp.eq.s32.totalorder %s23, 0
      %p124 = por %p122, %p123
      %p125 = scmp.ne.s32.totalorder %s114, %s117
      %p126 = scmp.eq.s32.totalorder %s28, 1
      %p127 = por %p125, %p126
      %p128 = scmp.ne.s32.totalorder %s117, %s118
      %p129 = scmp.eq.s32.totalorder %s28, 0
      %p130 = por %p128, %p129
      %p131 = scmp.ne.s32.totalorder %s117, %s118
      %p132 = scmp.eq.s32.totalorder %s29, 1
      %p133 = por %p131, %p132
      %p135 = scmp.ne.s32.totalorder %s118, %s134
      %p136 = scmp.eq.s32.totalorder %s29, 0
      %p137 = por %p135, %p136
      %s138 = ssub.s32 %s30, %s49
      %s139 = ssub.s32 %s31, %s45
      %s140 = sor.u32 %s138, %s139
      %p141 = scmp.eq.s32.totalorder %s140, 0
      %s143 = sadd.s32 %s142, 1
      %s144 = scalar_select %p141, %s142, %s143
      %p147 = pneg %p141
      %p148 = scmp.eq.s32.totalorder %s23, 1
      %p149 = por %p147, %p148
      %p150 = scmp.ne.s32.totalorder %s142, %s145
      %p151 = scmp.eq.s32.totalorder %s23, 0
      %p152 = por %p150, %p151
      %p153 = scmp.ne.s32.totalorder %s142, %s145
      %p154 = scmp.eq.s32.totalorder %s28, 1
      %p155 = por %p153, %p154
      %p156 = scmp.ne.s32.totalorder %s145, %s146
      %p157 = scmp.eq.s32.totalorder %s28, 0
      %p158 = por %p156, %p157
      %p159 = scmp.ne.s32.totalorder %s145, %s146
      %p160 = scmp.eq.s32.totalorder %s29, 1
      %p161 = por %p159, %p160
      %p163 = scmp.ne.s32.totalorder %s146, %s162
      %p164 = scmp.eq.s32.totalorder %s29, 0
      %p165 = por %p163, %p164
      %s166 = ssub.s32 %s30, %s49
      %s167 = ssub.s32 %s31, %s45
      %s168 = sor.u32 %s166, %s167
      %p169 = scmp.eq.s32.totalorder %s168, 0
      %s171 = sadd.s32 %s170, 1
      %s172 = scalar_select %p169, %s170, %s171
      %p175 = pneg %p169
      %p176 = scmp.eq.s32.totalorder %s23, 1
      %p177 = por %p175, %p176
      %p178 = scmp.ne.s32.totalorder %s170, %s173
      %p179 = scmp.eq.s32.totalorder %s23, 0
      %p180 = por %p178, %p179
      %p181 = scmp.ne.s32.totalorder %s170, %s173
      %p182 = scmp.eq.s32.totalorder %s28, 1
      %p183 = por %p181, %p182
      %p184 = scmp.ne.s32.totalorder %s173, %s174
      %p185 = scmp.eq.s32.totalorder %s28, 0
      %p186 = por %p184, %p185
      %p187 = scmp.ne.s32.totalorder %s173, %s174
      %p188 = scmp.eq.s32.totalorder %s29, 1
      %p189 = por %p187, %p188
      %p191 = scmp.ne.s32.totalorder %s174, %s190
      %p192 = scmp.eq.s32.totalorder %s29, 0
      %p193 = por %p191, %p192
      %p194 = scmp.le.s32.totalorder 1, %s23
      %p195 = scmp.lt.s32.totalorder %s23, 3
      %p196 = pnand %p194, %p195
      %p197 = pneg %p196
      // Predicated region
      $region9: #{tpu_custom_call.1} parent=5 // pred_check
        _
      $region10: #{tpu_custom_call.1} parent=5 // pred_check_branch
        %199 = sbr.rel (%p196) target = $region12
      $region11: #{tpu_custom_call.1} parent=5 // pred_region
        %s200 = ssub.s32 %s23, 1
      $region12: #{tpu_custom_call.1} parent=5 // pred_fallthru
        _
      %p201 = scmp.lt.s32.totalorder %s23, 2
      // Predicated region
      $region13: #{tpu_custom_call.1} parent=5 // pred_check
        %p202 = pneg %p201
      $region14: #{tpu_custom_call.1} parent=5 // pred_check_branch
        %204 = sbr.rel (%p202) target = $region16
      $region15: #{tpu_custom_call.1} parent=5 // pred_region
        // Predicated region
        $region17: #{tpu_custom_call.1} parent=15 // pred_check
          %p205 = pneg %p66
        $region18: #{tpu_custom_call.1} parent=15 // pred_check_branch
          %207 = sbr.rel (%p205) target = $region20
        $region19: #{tpu_custom_call.1} parent=15 // pred_region
          %s208 = sand.u32 %s56, 1
          %s209 = scalar_lea.sflag [#allocation3], %s208
          %s210 = sand.u32 %s56, 1
          %s211 = smul.addr %s210, 8
          %s212 = scalar_lea.vmem [#allocation2], %s211
          %s213 = sadd.s32 %s31, %s32
          %s215 = ssub.s32 128, 128
          %216 = vsyncadd %s209, %s215
          %s217 = smul.addr %s30, 4
          %s218 = sadd.s32 %s213, %s217
          %s219 = smul.addr %s218, 32
          %s220 = scalar_lea.hbm %s0, %s219
          %s221 = sshll.u32 %s212, 4
          %s222 = int_to_ptr.vmem [resolvable:$true] %s221
          %227 = dma.hbm_to_vmem [thread:$0]  %s220, 128, %s222, %s209, 32, 32, 2
        $region20: #{tpu_custom_call.1} parent=15 // pred_fallthru
          _
        // Predicated region
        $region21: #{tpu_custom_call.1} parent=15 // pred_check
          %p228 = pneg %p96
        $region22: #{tpu_custom_call.1} parent=15 // pred_check_branch
          %230 = sbr.rel (%p228) target = $region24
        $region23: #{tpu_custom_call.1} parent=15 // pred_region
          %s231 = sand.u32 %s86, 1
          %s232 = scalar_lea.sflag [#allocation6], %s231
          %s233 = sand.u32 %s86, 1
          %s234 = smul.addr %s233, 2
          %s235 = scalar_lea.vmem [#allocation5], %s234
          %s236 = sadd.s32 %s31, %s32
          %s238 = ssub.s32 32, 32
          %239 = vsyncadd %s232, %s238
          %s240 = sadd.s32 %s236, %s30
          %s241 = smul.addr %s240, 32
          %s242 = scalar_lea.hbm %s1, %s241
          %s244 = sshll.u32 %s235, 4
          %s245 = int_to_ptr.vmem [resolvable:$true] %s244
          %247 = dma.hbm_to_vmem [thread:$0]  %s242, 32, %s245, %s232
        $region24: #{tpu_custom_call.1} parent=15 // pred_fallthru
          _
      $region16: #{tpu_custom_call.1} parent=5 // pred_fallthru
        _
      %p248 = scmp.le.s32.totalorder 1, %s23
      %p249 = scmp.lt.s32.totalorder %s23, 3
      %p250 = pnand %p248, %p249
      %p251 = pneg %p250
      // Predicated region
      $region25: #{tpu_custom_call.1} parent=5 // pred_check
        _
      $region26: #{tpu_custom_call.1} parent=5 // pred_check_branch
        %253 = sbr.rel (%p250) target = $region28
      $region27: #{tpu_custom_call.1} parent=5 // pred_region
        %s254 = ssub.s32 %s23, 1
        %s255 = sand.u32 %s59, 1
        %s256 = scalar_lea.sflag [#allocation3], %s255
        %s257 = sand.u32 %s59, 1
        %s258 = smul.addr %s257, 8
        %s259 = scalar_lea.vmem [#allocation2], %s258
        // Predicated region
        $region29: #{tpu_custom_call.1} parent=27 // pred_check
          %p260 = pneg %p72
        $region30: #{tpu_custom_call.1} parent=27 // pred_check_branch
          %262 = sbr.rel (%p260) target = $region32
        $region31: #{tpu_custom_call.1} parent=27 // pred_region
          %263 = dma.done %s256, 128
        $region32: #{tpu_custom_call.1} parent=27 // pred_fallthru
          _
        %s264 = sand.u32 %s89, 1
        %s265 = scalar_lea.sflag [#allocation6], %s264
        %s266 = sand.u32 %s89, 1
        %s267 = smul.addr %s266, 2
        %s268 = scalar_lea.vmem [#allocation5], %s267
        // Predicated region
        $region33: #{tpu_custom_call.1} parent=27 // pred_check
          %p269 = pneg %p102
        $region34: #{tpu_custom_call.1} parent=27 // pred_check_branch
          %271 = sbr.rel (%p269) target = $region36
        $region35: #{tpu_custom_call.1} parent=27 // pred_region
          %272 = dma.done %s265, 32
        $region36: #{tpu_custom_call.1} parent=27 // pred_fallthru
          _
        %s273 = sand.u32 %s59, 1
        %s274 = scalar_lea.sflag [#allocation3], %s273
        %s275 = sand.u32 %s59, 1
        %s276 = smul.addr %s275, 8
        %s277 = scalar_lea.vmem [#allocation2], %s276
        %p278 = pneg %p72
        %p279 = pneg %p69
        %s280 = sand.u32 %s89, 1
        %s281 = scalar_lea.sflag [#allocation6], %s280
        %s282 = sand.u32 %s89, 1
        %s283 = smul.addr %s282, 2
        %s284 = scalar_lea.vmem [#allocation5], %s283
        %p285 = pneg %p102
        %p286 = pneg %p99
        %p287 = pneg %p130
        %p288 = pneg %p127
        %s289 = sand.u32 %s117, 1
        %s290 = scalar_lea.sflag [#allocation4], %s289
        %s291 = sand.u32 %s117, 1
        %s292 = smul.addr %s291, 8
        %s293 = scalar_lea.vmem [#allocation7], %s292
        %p294 = pneg %p158
        %p295 = pneg %p155
        %s296 = sand.u32 %s28, 1
        %s297 = scalar_lea.sflag [#allocation9], %s296
        %s298 = sand.u32 %s145, 1
        %s299 = smul.addr %s298, 8
        %s300 = scalar_lea.vmem [#allocation8], %s299
        %p301 = pneg %p186
        %p302 = pneg %p183
        %s303 = sand.u32 %s28, 1
        %s304 = scalar_lea.sflag [#allocation9], %s303
        %s305 = sand.u32 %s173, 1
        %s306 = smul.addr %s305, 8
        %s307 = scalar_lea.vmem [#allocation10], %s306
        %s308 = sadd.s32 %s34, %s35
        %s309 = sadd.s32 %s34, %s35
        %p310 = scmp.eq.s32.totalorder %s35, 0
        // Predicated region
        $region37: #{tpu_custom_call.1} parent=27 // pred_check
          %p311 = pneg %p310
        $region38: #{tpu_custom_call.1} parent=27 // pred_check_branch
          %313 = sbr.rel (%p311) target = $region40
        $region39: #{tpu_custom_call.1} parent=27 // pred_region
          %314 = vst [vmem:[%s293] sm:$0x3] 0.0
          %315 = vst [vmem:[%s293 + $0x2] sm:$0x3] 0.0
          %316 = vst [vmem:[%s293 + $0x4] sm:$0x3] 0.0
          %317 = vst [vmem:[%s293 + $0x6] sm:$0x3] 0.0
          %318 = vst [vmem:[%s300] sm:$0x3] 0.0
          %319 = vst [vmem:[%s300 + $0x2] sm:$0x3] 0.0
          %320 = vst [vmem:[%s300 + $0x4] sm:$0x3] 0.0
          %321 = vst [vmem:[%s300 + $0x6] sm:$0x3] 0.0
          %322 = vst [vmem:[%s307] sm:$0x3] 0.0
          %323 = vst [vmem:[%s307 + $0x2] sm:$0x3] 0.0
          %324 = vst [vmem:[%s307 + $0x4] sm:$0x3] 0.0
          %325 = vst [vmem:[%s307 + $0x6] sm:$0x3] 0.0
        $region40: #{tpu_custom_call.1} parent=27 // pred_fallthru
          _
        %v326 = vld [vmem:[%s268] sm:$0x3]
        %v327 = vld [vmem:[%s259] sm:$0x3]
        %s328 = scalar_lea.vmem %s259, 2 [#allocation2]
        %v329 = vld [vmem:[%s328] sm:$0x3]
        %s330 = scalar_lea.vmem %s259, 4 [#allocation2]
        %v331 = vld [vmem:[%s330] sm:$0x3]
        %s332 = scalar_lea.vmem %s259, 6 [#allocation2]
        %v333 = vld [vmem:[%s332] sm:$0x3]
        %v334 = vmax.f32 %v327, %v329
        %v335 = vmax.f32 %v334, %v331
        %v336 = vmax.f32 %v335, %v333
        %v337 = vsub.f32 %v327, %v336
        %v338 = vmul.f32 %v337, 1.442695
        %v339 = vpow.pop %v338
        %v340 = vsub.f32 %v329, %v336
        %v341 = vmul.f32 %v340, 1.442695
        %v342 = vpow.pop %v341
        %v343 = vsub.f32 %v331, %v336
        %v344 = vmul.f32 %v343, 1.442695
        %v345 = vpow.pop %v344
        %v346 = vsub.f32 %v333, %v336
        %v347 = vmul.f32 %v346, 1.442695
        %v348 = vpow.pop %v347
        %v349 = vadd.f32 %v339, %v342
        %v350 = vadd.f32 %v349, %v345
        %v351 = vadd.f32 %v350, %v348
        %v352 = vrcp.pop %v351
        %v353 = vmul.f32 %v339, %v352
        %v354 = vmul.f32 %v342, %v352
        %v355 = vmul.f32 %v345, %v352
        %v356 = vmul.f32 %v348, %v352
        %vm357 = vcmp.eq.s32.totalorder %v326, 0
        %v358 = vsel %vm357, %v353, 0.0
        %v359 = vmul.f32 %v353, %v353
        %v360 = vsel %vm357, 1, 0
        %v361 = vcvt.s32.f32 %v360
        %v362 = vld [vmem:[%s293] sm:$0x3]
        %v363 = vadd.f32 %v362, %v358
        %364 = vst [vmem:[%s293] sm:$0x3] %v363
        %v365 = vld [vmem:[%s300] sm:$0x3]
        %v366 = vadd.f32 %v365, %v359
        %367 = vst [vmem:[%s300] sm:$0x3] %v366
        %v368 = vld [vmem:[%s307] sm:$0x3]
        %v369 = vadd.f32 %v368, %v361
        %370 = vst [vmem:[%s307] sm:$0x3] %v369
        %vm371 = vcmp.eq.s32.totalorder %v326, 1
        %v372 = vsel %vm371, %v354, 0.0
        %v373 = vmul.f32 %v354, %v354
        %v374 = vsel %vm371, 1, 0
        %v375 = vcvt.s32.f32 %v374
        %s376 = scalar_lea.vmem %s293, 2 [#allocation7]
        %v377 = vld [vmem:[%s376] sm:$0x3]
        %v378 = vadd.f32 %v377, %v372
        %379 = vst [vmem:[%s376] sm:$0x3] %v378
        %s380 = scalar_lea.vmem %s300, 2 [#allocation8]
        %v381 = vld [vmem:[%s380] sm:$0x3]
        %v382 = vadd.f32 %v381, %v373
        %383 = vst [vmem:[%s380] sm:$0x3] %v382
        %s384 = scalar_lea.vmem %s307, 2 [#allocation10]
        %v385 = vld [vmem:[%s384] sm:$0x3]
        %v386 = vadd.f32 %v385, %v375
        %387 = vst [vmem:[%s384] sm:$0x3] %v386
        %vm388 = vcmp.eq.s32.totalorder %v326, 2
        %v389 = vsel %vm388, %v355, 0.0
        %v390 = vmul.f32 %v355, %v355
        %v391 = vsel %vm388, 1, 0
        %v392 = vcvt.s32.f32 %v391
        %s393 = scalar_lea.vmem %s293, 4 [#allocation7]
        %v394 = vld [vmem:[%s393] sm:$0x3]
        %v395 = vadd.f32 %v394, %v389
        %396 = vst [vmem:[%s393] sm:$0x3] %v395
        %s397 = scalar_lea.vmem %s300, 4 [#allocation8]
        %v398 = vld [vmem:[%s397] sm:$0x3]
        %v399 = vadd.f32 %v398, %v390
        %400 = vst [vmem:[%s397] sm:$0x3] %v399
        %s401 = scalar_lea.vmem %s307, 4 [#allocation10]
        %v402 = vld [vmem:[%s401] sm:$0x3]
        %v403 = vadd.f32 %v402, %v392
        %404 = vst [vmem:[%s401] sm:$0x3] %v403
        %vm405 = vcmp.eq.s32.totalorder %v326, 3
        %v406 = vsel %vm405, %v356, 0.0
        %v407 = vmul.f32 %v356, %v356
        %v408 = vsel %vm405, 1, 0
        %v409 = vcvt.s32.f32 %v408
        %s410 = scalar_lea.vmem %s293, 6 [#allocation7]
        %v411 = vld [vmem:[%s410] sm:$0x3]
        %v412 = vadd.f32 %v411, %v406
        %413 = vst [vmem:[%s410] sm:$0x3] %v412
        %s414 = scalar_lea.vmem %s300, 6 [#allocation8]
        %v415 = vld [vmem:[%s414] sm:$0x3]
        %v416 = vadd.f32 %v415, %v407
        %417 = vst [vmem:[%s414] sm:$0x3] %v416
        %s418 = scalar_lea.vmem %s307, 6 [#allocation10]
        %v419 = vld [vmem:[%s418] sm:$0x3]
        %v420 = vadd.f32 %v419, %v409
        %421 = vst [vmem:[%s418] sm:$0x3] %v420
        %s422 = sand.u32 %s117, 1
        %s423 = scalar_lea.sflag [#allocation4], %s422
        %s424 = sand.u32 %s117, 1
        %s425 = smul.addr %s424, 8
        %s426 = scalar_lea.vmem [#allocation7], %s425
        %s427 = sand.u32 %s28, 1
        %s428 = scalar_lea.sflag [#allocation9], %s427
        %s429 = sand.u32 %s145, 1
        %s430 = smul.addr %s429, 8
        %s431 = scalar_lea.vmem [#allocation8], %s430
        %s432 = sand.u32 %s28, 1
        %s433 = scalar_lea.sflag [#allocation9], %s432
        %s434 = sand.u32 %s173, 1
        %s435 = smul.addr %s434, 8
        %s436 = scalar_lea.vmem [#allocation10], %s435
        // Predicated region
        $region41: #{tpu_custom_call.1} parent=27 // pred_check
          %p437 = pneg %p127
        $region42: #{tpu_custom_call.1} parent=27 // pred_check_branch
          %439 = sbr.rel (%p437) target = $region44
        $region43: #{tpu_custom_call.1} parent=27 // pred_region
          %s441 = ssub.s32 128, 128
          %442 = vsyncadd %s423, %s441
          %s443 = smul.addr %s34, 4
          %s444 = smul.addr %s33, 4
          %s445 = sadd.s32 %s443, %s444
          %s446 = smul.addr %s445, 32
          %s447 = scalar_lea.hbm %s2, %s446
          %s448 = sshll.u32 %s426, 4
          %s449 = int_to_ptr.vmem [resolvable:$true] %s448
          %454 = dma.vmem_to_hbm [thread:$0]  %s449, 128, %s447, %s423, 32, 32, 2
        $region44: #{tpu_custom_call.1} parent=27 // pred_fallthru
          _
        // Predicated region
        $region45: #{tpu_custom_call.1} parent=27 // pred_check
          %p455 = pneg %p155
        $region46: #{tpu_custom_call.1} parent=27 // pred_check_branch
          %457 = sbr.rel (%p455) target = $region48
        $region47: #{tpu_custom_call.1} parent=27 // pred_region
          %s459 = ssub.s32 128, 128
          %460 = vsyncadd %s428, %s459
          %s461 = smul.addr %s34, 4
          %s462 = smul.addr %s33, 4
          %s463 = sadd.s32 %s461, %s462
          %s464 = smul.addr %s463, 32
          %s465 = scalar_lea.hbm %s3, %s464
          %s466 = sshll.u32 %s431, 4
          %s467 = int_to_ptr.vmem [resolvable:$true] %s466
          %472 = dma.vmem_to_hbm [thread:$0]  %s467, 128, %s465, %s428, 32, 32, 2
        $region48: #{tpu_custom_call.1} parent=27 // pred_fallthru
          _
        // Predicated region
        $region49: #{tpu_custom_call.1} parent=27 // pred_check
          %p473 = pneg %p183
        $region50: #{tpu_custom_call.1} parent=27 // pred_check_branch
          %475 = sbr.rel (%p473) target = $region52
        $region51: #{tpu_custom_call.1} parent=27 // pred_region
          %s477 = ssub.s32 128, 128
          %478 = vsyncadd %s433, %s477
          %s479 = smul.addr %s34, 4
          %s480 = smul.addr %s33, 4
          %s481 = sadd.s32 %s479, %s480
          %s482 = smul.addr %s481, 32
          %s483 = scalar_lea.hbm %s4, %s482
          %s484 = sshll.u32 %s436, 4
          %s485 = int_to_ptr.vmem [resolvable:$true] %s484
          %490 = dma.vmem_to_hbm [thread:$0]  %s485, 128, %s483, %s433, 32, 32, 2
        $region52: #{tpu_custom_call.1} parent=27 // pred_fallthru
          _
      $region28: #{tpu_custom_call.1} parent=5 // pred_fallthru
        _
      %p491 = scmp.le.s32.totalorder 2, %s23
      // Predicated region
      $region53: #{tpu_custom_call.1} parent=5 // pred_check
        %p492 = pneg %p491
      $region54: #{tpu_custom_call.1} parent=5 // pred_check_branch
        %494 = sbr.rel (%p492) target = $region56
      $region55: #{tpu_custom_call.1} parent=5 // pred_region
        %s495 = ssub.s32 %s23, 2
        // Predicated region
        $region57: #{tpu_custom_call.1} parent=55 // pred_check
          %p496 = pneg %p133
        $region58: #{tpu_custom_call.1} parent=55 // pred_check_branch
          %498 = sbr.rel (%p496) target = $region60
        $region59: #{tpu_custom_call.1} parent=55 // pred_region
          %s499 = sand.u32 %s118, 1
          %s500 = scalar_lea.sflag [#allocation4], %s499
          %s501 = sand.u32 %s118, 1
          %s502 = smul.addr %s501, 8
          %s503 = scalar_lea.vmem [#allocation7], %s502
          %504 = dma.done %s500, 128
        $region60: #{tpu_custom_call.1} parent=55 // pred_fallthru
          _
        // Predicated region
        $region61: #{tpu_custom_call.1} parent=55 // pred_check
          %p505 = pneg %p161
        $region62: #{tpu_custom_call.1} parent=55 // pred_check_branch
          %507 = sbr.rel (%p505) target = $region64
        $region63: #{tpu_custom_call.1} parent=55 // pred_region
          %s508 = sand.u32 %s29, 1
          %s509 = scalar_lea.sflag [#allocation9], %s508
          %s510 = sand.u32 %s146, 1
          %s511 = smul.addr %s510, 8
          %s512 = scalar_lea.vmem [#allocation8], %s511
          %513 = dma.done %s509, 128
        $region64: #{tpu_custom_call.1} parent=55 // pred_fallthru
          _
        // Predicated region
        $region65: #{tpu_custom_call.1} parent=55 // pred_check
          %p514 = pneg %p189
        $region66: #{tpu_custom_call.1} parent=55 // pred_check_branch
          %516 = sbr.rel (%p514) target = $region68
        $region67: #{tpu_custom_call.1} parent=55 // pred_region
          %s517 = sand.u32 %s29, 1
          %s518 = scalar_lea.sflag [#allocation9], %s517
          %s519 = sand.u32 %s174, 1
          %s520 = smul.addr %s519, 8
          %s521 = scalar_lea.vmem [#allocation10], %s520
          %522 = dma.done %s518, 128
        $region68: #{tpu_custom_call.1} parent=55 // pred_fallthru
          _
      $region56: #{tpu_custom_call.1} parent=5 // pred_fallthru
        _
    $region6: #{tpu_custom_call.1} parent=1 // loop_footer
      %s27 = sadd.s32 1, %s23
    $region7: #{tpu_custom_call.1} parent=1 // loop_footer_branch
      %22 = sbr.rel target = $region3
    $region8: #{tpu_custom_call.1} parent=1 // loop_exit
      _
    %523 = vsyncpa [#allocation3], 1
    %s524 = scalar_lea.sflag [#allocation3], 1
    %525 = vsyncpa %s524, 1
    %526 = vsyncpa [#allocation6], 1
    %s527 = scalar_lea.sflag [#allocation6], 1
    %528 = vsyncpa %s527, 1
    %529 = vsyncpa [#allocation4], 1
    %s530 = scalar_lea.sflag [#allocation4], 1
    %531 = vsyncpa %s530, 1
    %532 = vsyncpa [#allocation9], 1
    %s533 = scalar_lea.sflag [#allocation9], 1
    %534 = vsyncpa %s533, 1

</llo_original>
